<compile_context>
chip_gen: v7x
topology: tpu7x:2x2x1
jax: 0.10.0
libtpu: 0.0.40
codegen_flags: <defaults>
</compile_context>

<pallas_src>
import functools

import jax
import jax.numpy as jnp
from jax.experimental import pallas as pl
from jax.experimental.pallas import tpu as pltpu

LANE = 128


def _round_up(x, m):
    return ((x + m - 1) // m) * m


def _accuracy_kernel(yhat_ref, y_ref, cnt_ref, *, num_ch):
    """One grid step.

    yhat_ref: (tB, C, rt, 128) logits block (VMEM)
    y_ref:    (tB, rt, 128)    int32 label block (VMEM); padded pixels carry -1
    cnt_ref:  (1, 1)           SMEM partial count for this grid step
    """
    # Channel 0 seeds the running max / argmax.
    best = yhat_ref[:, 0, :, :].astype(jnp.float32)          # (tB, rt, 128)
    pred = jnp.zeros(best.shape, jnp.int32)

    # First-max-wins argmax over channels (matches torch.argmax / jnp.argmax).
    # Pure VPU compare+select loop; fully hidden under the block DMA.
    for c in range(1, num_ch):
        v = yhat_ref[:, c, :, :].astype(jnp.float32)
        take = v > best
        pred = jnp.where(take, jnp.int32(c), pred)
        best = jnp.where(take, v, best)

    # Padded pixels carry label -1, which no argmax result can equal -> contribute 0.
    correct = (pred == y_ref[...]).astype(jnp.int32)
    cnt_ref[0, 0] = jnp.sum(correct)                         # single XLU reduce / step


def accuracy(yhat, y, *, target_block_bytes=2 << 20):
    """JAX/Pallas equivalent of Accuracy.forward.

    yhat: (N, C, H, W) float logits (NCHW, like the PyTorch module)
    y:    (N, H, W)    integer class labels
    Returns a float32 scalar: sum(argmax(yhat, 1) == y) / (N*H*W).
    """
    N, C, H, W = yhat.shape
    total_pixels = N * H * W
    P = H * W

    # ---- lane-dense pixel layout: P -> (R rows, 128 lanes) ----
    R = pl.cdiv(P, LANE)
    bytes_per_row = C * LANE * 4          # f32 logits bytes per (row of 128 pixels)

    # Row tile: multiple of 8 sublanes, sized so a logits block is ~target_block_bytes.
    rt_cap = max(8, (target_block_bytes // bytes_per_row) // 8 * 8)
    if R <= rt_cap:
        rt, R_pad = R, R                  # whole image's rows in one step
    else:
        rt = rt_cap
        R_pad = _round_up(R, rt)
    P_pad = R_pad * LANE

    # Batch tile: only fold batch items together when one image fits in a single step.
    if rt == R:
        tB = max(1, min(N, target_block_bytes // max(1, R * bytes_per_row)))
    else:
        tB = 1
    N_pad = _round_up(N, tB)

    # ---- pad + reshape in the wrapper (contiguous reshapes; transpose-free) ----
    # TODO(synk): when P or N is not tile-aligned the pad below materialises one extra
    # HBM copy of the logits; an in-kernel iota mask would avoid it for ragged shapes.
    yhat_f = yhat.reshape(N, C, P)
    y_i = y.reshape(N, P).astype(jnp.int32)
    if P_pad != P or N_pad != N:
        yhat_f = jnp.pad(yhat_f, ((0, N_pad - N), (0, 0), (0, P_pad - P)))
        # -1 never equals an argmax result in [0, C), so padding contributes 0.
        y_i = jnp.pad(y_i, ((0, N_pad - N), (0, P_pad - P)), constant_values=-1)
    yhat_r = yhat_f.reshape(N_pad, C, R_pad, LANE)
    y_r = y_i.reshape(N_pad, R_pad, LANE)

    gb = N_pad // tB
    gr = R_pad // rt

    # Double-buffered logits + labels blocks, plus generous headroom, capped so the
    # request is legal on every chip generation (v7x scoped default is 32 MiB).
    logit_block = tB * C * rt * LANE * yhat_r.dtype.itemsize
    label_block = tB * rt * LANE * 4
    need = 2 * (logit_block + label_block) + (1 << 20)
    vmem_limit = int(min(32 * 1024 * 1024, max(16 * 1024 * 1024, need)))

    kernel = functools.partial(_accuracy_kernel, num_ch=C)

    counts = pl.pallas_call(
        kernel,
        grid=(gb, gr),
        in_specs=[
            pl.BlockSpec((tB, C, rt, LANE), lambda i, j: (i, 0, j, 0)),
            pl.BlockSpec((tB, rt, LANE), lambda i, j: (i, j, 0)),
        ],
        out_specs=pl.BlockSpec(
            (1, 1), lambda i, j: (i, j), memory_space=pltpu.MemorySpace.SMEM
        ),
        out_shape=jax.ShapeDtypeStruct((gb, gr), jnp.int32),
        compiler_params=pltpu.CompilerParams(
            dimension_semantics=("parallel", "parallel"),
            vmem_limit_bytes=vmem_limit,
        ),
    )(yhat_r, y_r)

    # Final glue (matches `acc = sum / (N*H*W)`); tiny partial-count sum done by XLA.
    total_correct = jnp.sum(counts).astype(jnp.float32)
    # TODO(synk): the torch module returns a host Python float via .numpy().item();
    # here we return a JAX scalar (caller can float() it).
    return total_correct / jnp.float32(total_pixels)


def _reference_accuracy(yhat, y):
    preds = jnp.argmax(yhat, axis=1)
    n, h, w = preds.shape
    return jnp.sum(preds == y).astype(jnp.float32) / jnp.float32(n * h * w)


if __name__ == "__main__":
    key = jax.random.PRNGKey(0)
    k1, k2 = jax.random.split(key)

    N, C, H, W = 2, 4, 16, 16
    yhat = jax.random.normal(k1, (N, C, H, W), dtype=jnp.float32)
    y = jax.random.randint(k2, (N, H, W), 0, C, dtype=jnp.int32)

    out = accuracy(yhat, y)
    out = jax.block_until_ready(out)

    ref = _reference_accuracy(yhat, y)
    assert jnp.allclose(out, ref, atol=1e-6), (out, ref)

    print("KERNEL_OK")
</pallas_src>

<mosaic_0001>
module attributes {stable_mosaic.version = 11 : i64} {
  func.func @_accuracy_kernel(%arg0: i32, %arg1: i32, %arg2: memref<2x4x2x128xf32, #tpu.memory_space<vmem>>, %arg3: memref<2x2x128xi32, #tpu.memory_space<vmem>>, %arg4: memref<1x1xi32, #tpu.memory_space<smem>>) attributes {dimension_semantics = [#tpu.dimension_semantics<parallel>, #tpu.dimension_semantics<parallel>], iteration_bounds = array<i64: 1, 1>, scalar_prefetch = 0 : i64, scratch_operands = 0 : i64, tpu.core_type = #tpu.core_type<tc>, window_params = [{transform_indices = @transform_0, window_bounds = array<i64: 2, 4, 2, 128>}, {transform_indices = @transform_1, window_bounds = array<i64: 2, 2, 128>}, {transform_indices = @transform_2, window_bounds = array<i64: 1, 1>}]} {
    %c0 = arith.constant 0 : index
    %c0_0 = arith.constant 0 : index
    %c0_1 = arith.constant 0 : index
    %c0_2 = arith.constant 0 : index
    %0 = vector.load %arg2[%c0, %c0_0, %c0_1, %c0_2] : memref<2x4x2x128xf32, #tpu.memory_space<vmem>>, vector<2x1x2x128xf32>
    %1 = vector.shape_cast %0 : vector<2x1x2x128xf32> to vector<2x2x128xf32>
    %c0_i32 = arith.constant 0 : i32
    %2 = vector.broadcast %c0_i32 : i32 to vector<2x2x128xi32>
    %c0_3 = arith.constant 0 : index
    %c1 = arith.constant 1 : index
    %c0_4 = arith.constant 0 : index
    %c0_5 = arith.constant 0 : index
    %3 = vector.load %arg2[%c0_3, %c1, %c0_4, %c0_5] : memref<2x4x2x128xf32, #tpu.memory_space<vmem>>, vector<2x1x2x128xf32>
    %4 = vector.shape_cast %3 : vector<2x1x2x128xf32> to vector<2x2x128xf32>
    %5 = arith.cmpf ogt, %4, %1 : vector<2x2x128xf32>
    %c1_i32 = arith.constant 1 : i32
    %6 = vector.broadcast %c1_i32 : i32 to vector<2x2x128xi32>
    %7 = arith.select %5, %6, %2 : vector<2x2x128xi1>, vector<2x2x128xi32>
    %8 = arith.select %5, %4, %1 : vector<2x2x128xi1>, vector<2x2x128xf32>
    %c0_6 = arith.constant 0 : index
    %c2 = arith.constant 2 : index
    %c0_7 = arith.constant 0 : index
    %c0_8 = arith.constant 0 : index
    %9 = vector.load %arg2[%c0_6, %c2, %c0_7, %c0_8] : memref<2x4x2x128xf32, #tpu.memory_space<vmem>>, vector<2x1x2x128xf32>
    %10 = vector.shape_cast %9 : vector<2x1x2x128xf32> to vector<2x2x128xf32>
    %11 = arith.cmpf ogt, %10, %8 : vector<2x2x128xf32>
    %c2_i32 = arith.constant 2 : i32
    %12 = vector.broadcast %c2_i32 : i32 to vector<2x2x128xi32>
    %13 = arith.select %11, %12, %7 : vector<2x2x128xi1>, vector<2x2x128xi32>
    %14 = arith.select %11, %10, %8 : vector<2x2x128xi1>, vector<2x2x128xf32>
    %c0_9 = arith.constant 0 : index
    %c3 = arith.constant 3 : index
    %c0_10 = arith.constant 0 : index
    %c0_11 = arith.constant 0 : index
    %15 = vector.load %arg2[%c0_9, %c3, %c0_10, %c0_11] : memref<2x4x2x128xf32, #tpu.memory_space<vmem>>, vector<2x1x2x128xf32>
    %16 = vector.shape_cast %15 : vector<2x1x2x128xf32> to vector<2x2x128xf32>
    %17 = arith.cmpf ogt, %16, %14 : vector<2x2x128xf32>
    %c3_i32 = arith.constant 3 : i32
    %18 = vector.broadcast %c3_i32 : i32 to vector<2x2x128xi32>
    %19 = arith.select %17, %18, %13 : vector<2x2x128xi1>, vector<2x2x128xi32>
    %c0_12 = arith.constant 0 : index
    %c0_13 = arith.constant 0 : index
    %c0_14 = arith.constant 0 : index
    %20 = vector.load %arg3[%c0_12, %c0_13, %c0_14] : memref<2x2x128xi32, #tpu.memory_space<vmem>>, vector<2x2x128xi32>
    %21 = arith.cmpi eq, %19, %20 : vector<2x2x128xi32>
    %22 = arith.extui %21 : vector<2x2x128xi1> to vector<2x2x128xi32>
    %23 = vector.shape_cast %22 : vector<2x2x128xi32> to vector<1x2x2x128xi32>
    %cst = arith.constant dense<0> : vector<1xi32>
    %24 = vector.multi_reduction <add>, %23, %cst [1, 2, 3] : vector<1x2x2x128xi32> to vector<1xi32>
    %25 = vector.shape_cast %24 : vector<1xi32> to vector<1x1x1x1xi32>
    %26 = vector.extract %25[0, 0, 0, 0] : i32 from vector<1x1x1x1xi32>
    %c0_15 = arith.constant 0 : index
    %c0_16 = arith.constant 0 : index
    %27 = memref.load %arg4[%c0_15, %c0_16] : memref<1x1xi32, #tpu.memory_space<smem>>
    memref.store %26, %arg4[%c0_15, %c0_16] : memref<1x1xi32, #tpu.memory_space<smem>>
    return
  }
  func.func @transform_0(%arg0: i32, %arg1: i32) -> (i32, i32, i32, i32) {
    %c0_i32 = arith.constant 0 : i32
    %c0_i32_0 = arith.constant 0 : i32
    %c0_i32_1 = arith.constant 0 : i32
    return %arg0, %c0_i32, %arg1, %c0_i32_0 : i32, i32, i32, i32
  }
  func.func @transform_1(%arg0: i32, %arg1: i32) -> (i32, i32, i32) {
    %c0_i32 = arith.constant 0 : i32
    %c0_i32_0 = arith.constant 0 : i32
    return %arg0, %arg1, %c0_i32 : i32, i32, i32
  }
  func.func @transform_2(%arg0: i32, %arg1: i32) -> (i32, i32) {
    %c0_i32 = arith.constant 0 : i32
    return %arg0, %arg1 : i32, i32
  }
}

</mosaic_0001>

<llo_original>
// kernel: tpu_custom_call.1
$region0: #{tpu_custom_call.1}
  #allocation0 [shape = 'u32[]', space=smem, size = 0x4, offset = 0x4, fixed_abs, tag = 'smem constant byte address 0x4 - core index']
  #allocation1 [shape = 'u32[144,128]{1,0:T(1,128)}', space=vmem, size = 0x12000, scoped, tag = 'internal scratch']
  %s0 = inlined_call_operand.hbm [shape: f32[2,4,2,128], index: 0, kind: input, shape index: {}]
  %s1 = inlined_call_operand.hbm [shape: s32[2,2,128], index: 1, kind: input, shape index: {}]
  %s2 = inlined_call_operand.hbm [shape: s32[1,1], index: 2, kind: output, shape index: {}]
  %s3 = sld [smem:[#allocation0]]
  $region26: #{tpu_custom_call.1} parent=0
    _
  %s5 = ssub.s32 1, %s3
  %s6 = scalar_select 0, %s5, %s3
  $region1: #{tpu_custom_call.1} parent=0
    #allocation2 [shape = 'u8[8192]{0}', space=vmem, size = 0x2000, scoped, tag = 'input window, operand 0, single buffered']
    #allocation3 [shape = 's32[1]{0}', space=sflag, size = 0x4, scoped, tag = 'scoped memory for tpu_custom_call.1']
    #allocation4 [shape = 's32[1]{0}', space=sflag, size = 0x4, scoped, tag = 'scoped memory for tpu_custom_call.1']
    #allocation5 [shape = 'u8[2048]{0}', space=vmem, size = 0x800, scoped, tag = 'input window, operand 1, single buffered']
    #allocation6 [shape = 's32[1]{0}', space=sflag, size = 0x4, scoped, tag = 'scoped memory for tpu_custom_call.1']
    #allocation7 [shape = 'u8[512]{0}', space=smem, size = 0x200, scoped, tag = 'output window, operand 0, single buffered']
    %7 = vsyncpa [#allocation3], 0
    %8 = vsyncpa [#allocation6], 0
    %9 = vsyncpa [#allocation4], 0
    // Predicated region
    $region2: #{tpu_custom_call.1} parent=1 // pred_check
      _
    $region3: #{tpu_custom_call.1} parent=1 // pred_check_branch
      %11 = sbr.rel (0) target = $region5
    $region4: #{tpu_custom_call.1} parent=1 // pred_region
      %s13 = ssub.s32 256, 256
      %14 = vsyncadd [#allocation3], %s13
      %s15 = sshll.u32 [#allocation2], 4
      %s16 = int_to_ptr.vmem [resolvable:$true] %s15
      %21 = dma.hbm_to_vmem [thread:$0]  %s0, 256, %s16, [#allocation3], 32, 32, 2
    $region5: #{tpu_custom_call.1} parent=1 // pred_fallthru
      _
    // Predicated region
    $region6: #{tpu_custom_call.1} parent=1 // pred_check
      _
    $region7: #{tpu_custom_call.1} parent=1 // pred_check_branch
      %23 = sbr.rel (0) target = $region9
    $region8: #{tpu_custom_call.1} parent=1 // pred_region
      %s25 = ssub.s32 64, 64
      %26 = vsyncadd [#allocation6], %s25
      %s27 = sshll.u32 [#allocation5], 4
      %s28 = int_to_ptr.vmem [resolvable:$true] %s27
      %33 = dma.hbm_to_vmem [thread:$0]  %s1, 64, %s28, [#allocation6], 32, 32, 2
    $region9: #{tpu_custom_call.1} parent=1 // pred_fallthru
      _
    // Predicated region
    $region10: #{tpu_custom_call.1} parent=1 // pred_check
      _
    $region11: #{tpu_custom_call.1} parent=1 // pred_check_branch
      %35 = sbr.rel (0) target = $region13
    $region12: #{tpu_custom_call.1} parent=1 // pred_region
      %36 = dma.done [#allocation3], 256
    $region13: #{tpu_custom_call.1} parent=1 // pred_fallthru
      _
    // Predicated region
    $region14: #{tpu_custom_call.1} parent=1 // pred_check
      _
    $region15: #{tpu_custom_call.1} parent=1 // pred_check_branch
      %38 = sbr.rel (0) target = $region17
    $region16: #{tpu_custom_call.1} parent=1 // pred_region
      %39 = dma.done [#allocation6], 64
    $region17: #{tpu_custom_call.1} parent=1 // pred_fallthru
      _
    %v40 = vld [vmem:[#allocation2] sm:$0x3]
    %v41 = vld [vmem:[#allocation2 + $0x8] sm:$0x3]
    %s42 = scalar_lea.vmem [#allocation2], 2
    %v43 = vld [vmem:[%s42] sm:$0x3]
    %v44 = vld [vmem:[%s42 + $0x8] sm:$0x3]
    %vm45 = vcmp.gt.f32.partialorder %v43, %v40
    %vm46 = vcmp.gt.f32.partialorder %v44, %v41
    %v47 = vsel %vm45, 1, 0
    %v48 = vsel %vm46, 1, 0
    %v49 = vsel %vm45, %v43, %v40
    %v50 = vsel %vm46, %v44, %v41
    %s51 = scalar_lea.vmem [#allocation2], 4
    %v52 = vld [vmem:[%s51] sm:$0x3]
    %v53 = vld [vmem:[%s51 + $0x8] sm:$0x3]
    %vm54 = vcmp.gt.f32.partialorder %v52, %v49
    %vm55 = vcmp.gt.f32.partialorder %v53, %v50
    %v56 = vsel %vm54, 2, %v47
    %v57 = vsel %vm55, 2, %v48
    %v58 = vsel %vm54, %v52, %v49
    %v59 = vsel %vm55, %v53, %v50
    %s60 = scalar_lea.vmem [#allocation2], 6
    %v61 = vld [vmem:[%s60] sm:$0x3]
    %v62 = vld [vmem:[%s60 + $0x8] sm:$0x3]
    %vm63 = vcmp.gt.f32.partialorder %v61, %v58
    %vm64 = vcmp.gt.f32.partialorder %v62, %v59
    %v65 = vsel %vm63, 3, %v56
    %v66 = vsel %vm64, 3, %v57
    %v67 = vld [vmem:[#allocation5] sm:$0x3]
    %v68 = vld [vmem:[#allocation5 + $0x2] sm:$0x3]
    %vm69 = vcmp.eq.s32.totalorder %v65, %v67
    %vm70 = vcmp.eq.s32.totalorder %v66, %v68
    %v71 = vsel %vm69, 1, 0
    %v72 = vsel %vm70, 1, 0
    %vm73 = vcmask 1041408
    %v74 = vsel %vm73, %v71, 0
    %v75 = vsel %vm73, %v72, 0
    %v76 = vadd.s32 %v74, %v75
    %v77 = vand.u32 %v76, 65535
    %v78 = vshrl.u32 %v76, 16
    %v79 = vcvt.s32.f32 %v77
    %v80 = vcvt.s32.f32 %v78
    %81 = vadd.xlane.f32.xlu0 %v79
    %v82 = vpop.xlane.xlu0 %81
    %83 = vadd.xlane.f32.xlu0 %v80
    %v84 = vpop.xlane.xlu0 %83
    %v85 = vcvt.f32.s32 %v82
    %v86 = vcvt.f32.s32 %v84
    %v87 = vshll.u32 %v86, 16
    %v88 = vadd.s32 %v87, %v85
    %v89 = vrot.slane %v88, 4
    %v90 = vadd.s32 %v88, %v89
    %v91 = vrot.slane %v90, 2
    %v92 = vadd.s32 %v90, %v91
    %v93 = vrot.slane %v92, 1
    %v94 = vadd.s32 %v92, %v93
    %s95 = vtos %v94
    %s96 = scalar_lea.smem [#allocation7], 0
    %97 = sst [smem:[%s96]] %s95
    // Predicated region
    $region18: #{tpu_custom_call.1} parent=1 // pred_check
      _
    $region19: #{tpu_custom_call.1} parent=1 // pred_check_branch
      %99 = sbr.rel (0) target = $region21
    $region20: #{tpu_custom_call.1} parent=1 // pred_region
      %s101 = ssub.s32 16, 16
      %102 = vsyncadd [#allocation4], %s101
      %105 = dma.smem_to_hbm [#allocation7], 16, %s2, [#allocation4]
    $region21: #{tpu_custom_call.1} parent=1 // pred_fallthru
      _
    // Predicated region
    $region22: #{tpu_custom_call.1} parent=1 // pred_check
      _
    $region23: #{tpu_custom_call.1} parent=1 // pred_check_branch
      %107 = sbr.rel (0) target = $region25
    $region24: #{tpu_custom_call.1} parent=1 // pred_region
      %108 = dma.done [#allocation4], 16
    $region25: #{tpu_custom_call.1} parent=1 // pred_fallthru
      _
    %109 = sfence
    %110 = vsyncpa [#allocation3], 1
    %111 = vsyncpa [#allocation6], 1
    %112 = vsyncpa [#allocation4], 1

</llo_original>
